<compile_context>
chip_gen: v5e
topology: v5e:2x2
jax: 0.10.0
libtpu: 0.0.40
codegen_flags: <defaults>
</compile_context>

<pallas_src>
import functools
import math

import jax
import jax.numpy as jnp
from jax import lax
from jax.experimental import pallas as pl
from jax.experimental.pallas import tpu as pltpu

LN_EPS = 1e-12                       # BERT LayerNorm eps
VMEM_LIMIT = 32 * 1024 * 1024        # explicit scoped-VMEM budget


# ----------------------------- in-kernel helpers -----------------------------

def _layernorm(x, gamma, beta):
    # x: (S, H) f32, gamma/beta: (1, H) f32
    mean = jnp.mean(x, axis=-1, keepdims=True)
    var = jnp.mean(jnp.square(x - mean), axis=-1, keepdims=True)
    inv = jax.lax.rsqrt(var + LN_EPS)
    return (x - mean) * inv * gamma + beta


def _gelu(x):
    # tanh-approx GELU (EUP-friendly)
    c = math.sqrt(2.0 / math.pi)
    return 0.5 * x * (1.0 + jnp.tanh(c * (x + 0.044715 * x * x * x)))


# ------------------------------ Pallas kernels --------------------------------

def embed_ln_kernel(we_ref, pt_ref, g_ref, b_ref, o_ref):
    # we_ref: (1, S, H) bf16 gathered word embeddings for this batch element
    # pt_ref: (S, H) f32 position + token-type embeddings (shared, whole in VMEM)
    x = we_ref[0].astype(jnp.float32) + pt_ref[...]
    o_ref[0] = _layernorm(x, g_ref[...], b_ref[...]).astype(o_ref.dtype)


def layer_kernel(x_ref, bias_ref,
                 wqkv_ref, bqkv_ref, wo_ref, bo_ref, ln1_g_ref, ln1_b_ref,
                 w1_ref, b1_ref, w2_ref, b2_ref, ln2_g_ref, ln2_b_ref,
                 o_ref, *, num_heads):
    """One fused BERT encoder layer for a single batch element."""
    x = x_ref[0]                                    # (S, H) bf16
    S, H = x.shape
    dh = H // num_heads
    scale = 1.0 / math.sqrt(dh)

    # --- fused QKV projection: one MXU contraction with N = 3H ---
    qkv = jnp.dot(x, wqkv_ref[...],
                  preferred_element_type=jnp.float32) + bqkv_ref[...]   # (S, 3H) f32
    # fold 1/sqrt(dh) into q (S*H multiplies instead of heads*S*S)
    q = (qkv[:, :H] * scale).astype(jnp.bfloat16)                       # (S, H)
    k = qkv[:, H:2 * H].astype(jnp.bfloat16)                            # (S, H)
    v = qkv[:, 2 * H:].astype(jnp.bfloat16)                             # (S, H)
    bias = bias_ref[0]                                                  # (1, S) f32

    # --- per-head attention, statically unrolled, static lane slices only ---
    # (avoids the 3-D reshape + sublane transpose a batched einsum would need)
    ctx_parts = []
    for hd in range(num_heads):
        lo = hd * dh
        qh = q[:, lo:lo + dh]                       # (S, dh)
        kh = k[:, lo:lo + dh]
        vh = v[:, lo:lo + dh]
        s = lax.dot_general(                        # q @ k^T on the MXU (NT form)
            qh, kh,
            dimension_numbers=(((1,), (1,)), ((), ())),
            preferred_element_type=jnp.float32)     # (S, S) f32
        s = s + bias                                # key-side additive mask
        s = s - jnp.max(s, axis=-1, keepdims=True)
        p = jnp.exp(s)
        p = p * pl.reciprocal(jnp.sum(p, axis=-1, keepdims=True), approx=True)
        ctx_parts.append(jnp.dot(p.astype(jnp.bfloat16), vh,
                                 preferred_element_type=jnp.float32))   # (S, dh)
    ctx = jnp.concatenate(ctx_parts, axis=-1)                           # (S, H) f32

    attn_out = jnp.dot(ctx.astype(jnp.bfloat16), wo_ref[...],
                       preferred_element_type=jnp.float32) + bo_ref[...]
    y1 = _layernorm(x.astype(jnp.float32) + attn_out,
                    ln1_g_ref[...], ln1_b_ref[...])                     # (S, H) f32

    # --- feed-forward + residual + LayerNorm ---
    ff = jnp.dot(y1.astype(jnp.bfloat16), w1_ref[...],
                 preferred_element_type=jnp.float32) + b1_ref[...]
    ff = _gelu(ff)
    y2 = jnp.dot(ff.astype(jnp.bfloat16), w2_ref[...],
                 preferred_element_type=jnp.float32) + b2_ref[...]
    o_ref[0] = _layernorm(y1 + y2, ln2_g_ref[...], ln2_b_ref[...]).astype(o_ref.dtype)


# --------------------------------- wrappers ------------------------------------

def _vmem_spec():
    # Grid-invariant tensor: keep the whole array resident in VMEM,
    # single-buffered (no per-grid-step double-buffer DMA).
    return pl.BlockSpec(memory_space=pltpu.MemorySpace.VMEM)


def embed_ln(we, pt, gamma, beta):
    B, S, H = we.shape
    return pl.pallas_call(
        embed_ln_kernel,
        out_shape=jax.ShapeDtypeStruct((B, S, H), jnp.bfloat16),
        grid=(B,),
        in_specs=[pl.BlockSpec((1, S, H), lambda b: (b, 0, 0)),
                  _vmem_spec(), _vmem_spec(), _vmem_spec()],
        out_specs=pl.BlockSpec((1, S, H), lambda b: (b, 0, 0)),
        compiler_params=pltpu.CompilerParams(
            dimension_semantics=("parallel",),
            vmem_limit_bytes=VMEM_LIMIT),
    )(we, pt, gamma, beta)


def encoder_layer(x, attn_bias, lyr, *, num_heads):
    B, S, H = x.shape
    ffn = lyr["w1"].shape[-1]
    dh = H // num_heads

    flops = int(2 * B * S * H * 3 * H              # fused QKV
                + 4 * B * num_heads * S * S * dh   # scores + context
                + 2 * B * S * H * H                # output projection
                + 4 * B * S * H * ffn)             # FFN (two matmuls)
    transcendentals = int(B * num_heads * S * S + B * S * ffn)
    weight_bytes = sum(int(v.size) * v.dtype.itemsize for v in lyr.values())
    bytes_accessed = int(weight_bytes + 2 * B * S * H * 2 + B * S * 4)

    kernel = functools.partial(layer_kernel, num_heads=num_heads)
    return pl.pallas_call(
        kernel,
        out_shape=jax.ShapeDtypeStruct((B, S, H), jnp.bfloat16),
        grid=(B,),
        in_specs=[pl.BlockSpec((1, S, H), lambda b: (b, 0, 0)),   # activations
                  pl.BlockSpec((1, 1, S), lambda b: (b, 0, 0))]   # attn bias
                 + [_vmem_spec()] * 12,                           # layer weights
        out_specs=pl.BlockSpec((1, S, H), lambda b: (b, 0, 0)),
        compiler_params=pltpu.CompilerParams(
            dimension_semantics=("parallel",),
            vmem_limit_bytes=VMEM_LIMIT),
        cost_estimate=pl.CostEstimate(flops=flops,
                                      transcendentals=transcendentals,
                                      bytes_accessed=bytes_accessed),
    )(x, attn_bias,
      lyr["wqkv"], lyr["bqkv"], lyr["wo"], lyr["bo"], lyr["ln1_g"], lyr["ln1_b"],
      lyr["w1"], lyr["b1"], lyr["w2"], lyr["b2"], lyr["ln2_g"], lyr["ln2_b"])


def init_params(key, vocab, max_pos, H, num_heads, ffn, num_layers):
    keys = iter(jax.random.split(key, 4 + num_layers * 8))

    def nrm(shape):
        return (0.02 * jax.random.normal(next(keys), shape,
                                         dtype=jnp.float32)).astype(jnp.bfloat16)

    params = {
        "word_emb": nrm((vocab, H)),
        "pos_emb": nrm((max_pos, H)),
        "type_emb": nrm((2, H)),
        "emb_ln_g": jnp.ones((1, H), jnp.float32),
        "emb_ln_b": jnp.zeros((1, H), jnp.float32),
        "layers": [],
    }
    for _ in range(num_layers):
        layer = {
            # packed QKV weight/bias: wq|wk|wv -> (H, 3H)
            "wqkv": nrm((H, 3 * H)), "bqkv": jnp.zeros((1, 3 * H), jnp.float32),
            "wo": nrm((H, H)), "bo": jnp.zeros((1, H), jnp.float32),
            "ln1_g": jnp.ones((1, H), jnp.float32),
            "ln1_b": jnp.zeros((1, H), jnp.float32),
            "w1": nrm((H, ffn)), "b1": jnp.zeros((1, ffn), jnp.float32),
            "w2": nrm((ffn, H)), "b2": jnp.zeros((1, H), jnp.float32),
            "ln2_g": jnp.ones((1, H), jnp.float32),
            "ln2_b": jnp.zeros((1, H), jnp.float32),
        }
        params["layers"].append(layer)
    return params


def transformer_embeddings_forward(token_ids, lengths, params, *, num_heads):
    """Mirrors TransformerEmbeddings.forward: (dropout(last_hidden_states), lengths)."""
    B, S = token_ids.shape
    H = params["word_emb"].shape[-1]
    assert H % num_heads == 0

    # glue (plain JAX): embedding gather + shared position/type slab + key mask
    we = jnp.take(params["word_emb"], token_ids, axis=0)                   # (B,S,H) bf16
    pt = (params["pos_emb"][:S].astype(jnp.float32)
          + params["type_emb"][0].astype(jnp.float32)[None, :])            # (S,H) f32
    lengths_arr = jnp.asarray(lengths, jnp.int32)
    key_mask = jnp.arange(S, dtype=jnp.int32)[None, :] < lengths_arr[:, None]
    attn_bias = jnp.where(key_mask, 0.0, -1e9).astype(jnp.float32)[:, None, :]  # (B,1,S)

    # embeddings sum + LayerNorm (Pallas)
    h = embed_ln(we, pt, params["emb_ln_g"], params["emb_ln_b"])

    # fused encoder layers (Pallas, one call per layer)
    for lyr in params["layers"]:
        h = encoder_layer(h, attn_bias, lyr, num_heads=num_heads)

    # dropout with p=0.0 (module default) -> identity.
    # TODO(synk): training-mode dropout (p>0) would use pltpu.prng_seed/prng_random_bits.
    last_hidden_states = h.astype(jnp.float32)
    return last_hidden_states, lengths


# ----------------------------------- main ---------------------------------------

if __name__ == "__main__":
    key = jax.random.PRNGKey(0)
    k_param, k_tok = jax.random.split(key)

    # Small shapes (module's real embedding_dim is 1024; H=32 for the demo).
    B, S, H, NUM_HEADS, FFN, NUM_LAYERS = 2, 8, 32, 4, 64, 2
    VOCAB, MAX_POS = 50, 16

    params = init_params(k_param, VOCAB, MAX_POS, H, NUM_HEADS, FFN, NUM_LAYERS)

    # Synthetic "tokenized + padded" sentences (proxy for self.tokenize()).
    lengths = [8, 5]
    ids = jax.random.randint(k_tok, (B, S), 1, VOCAB, dtype=jnp.int32)
    mask = jnp.arange(S)[None, :] < jnp.asarray(lengths)[:, None]
    token_ids = jnp.where(mask, ids, 0)   # pad_sequence pads with 0

    out, out_lengths = transformer_embeddings_forward(
        token_ids, lengths, params, num_heads=NUM_HEADS
    )
    jax.block_until_ready(out)
    assert out.shape == (B, S, H) and out.dtype == jnp.float32
    assert bool(jnp.all(jnp.isfinite(out)))
    assert out_lengths == lengths
    print("KERNEL_OK")
</pallas_src>

<mosaic_0001>
module attributes {stable_mosaic.version = 11 : i64} {
  func.func @embed_ln_kernel(%arg0: i32, %arg1: memref<1x8x32xbf16, #tpu.memory_space<vmem>>, %arg2: memref<8x32xf32, #tpu.memory_space<vmem>>, %arg3: memref<1x32xf32, #tpu.memory_space<vmem>>, %arg4: memref<1x32xf32, #tpu.memory_space<vmem>>, %arg5: memref<1x8x32xbf16, #tpu.memory_space<vmem>>) attributes {dimension_semantics = [#tpu.dimension_semantics<parallel>], iteration_bounds = array<i64: 2>, scalar_prefetch = 0 : i64, scratch_operands = 0 : i64, tpu.core_type = #tpu.core_type<tc>, window_params = [{transform_indices = @transform_0, window_bounds = array<i64: 1, 8, 32>}, {pipeline_mode = #tpu.pipeline_mode<synchronous>, transform_indices = @transform_1, window_bounds = array<i64: 8, 32>}, {pipeline_mode = #tpu.pipeline_mode<synchronous>, transform_indices = @transform_2, window_bounds = array<i64: 1, 32>}, {pipeline_mode = #tpu.pipeline_mode<synchronous>, transform_indices = @transform_3, window_bounds = array<i64: 1, 32>}, {transform_indices = @transform_4, window_bounds = array<i64: 1, 8, 32>}]} {
    %c0 = arith.constant 0 : index
    %c0_0 = arith.constant 0 : index
    %c0_1 = arith.constant 0 : index
    %0 = vector.load %arg1[%c0, %c0_0, %c0_1] : memref<1x8x32xbf16, #tpu.memory_space<vmem>>, vector<1x8x32xbf16>
    %1 = vector.shape_cast %0 : vector<1x8x32xbf16> to vector<8x32xbf16>
    %2 = arith.extf %1 : vector<8x32xbf16> to vector<8x32xf32>
    %c0_2 = arith.constant 0 : index
    %c0_3 = arith.constant 0 : index
    %3 = vector.load %arg2[%c0_2, %c0_3] : memref<8x32xf32, #tpu.memory_space<vmem>>, vector<8x32xf32>
    %4 = arith.addf %2, %3 : vector<8x32xf32>
    %c0_4 = arith.constant 0 : index
    %c0_5 = arith.constant 0 : index
    %5 = vector.load %arg3[%c0_4, %c0_5] : memref<1x32xf32, #tpu.memory_space<vmem>>, vector<1x32xf32>
    %c0_6 = arith.constant 0 : index
    %c0_7 = arith.constant 0 : index
    %6 = vector.load %arg4[%c0_6, %c0_7] : memref<1x32xf32, #tpu.memory_space<vmem>>, vector<1x32xf32>
    %cst = arith.constant dense<0.000000e+00> : vector<8xf32>
    %7 = vector.multi_reduction <add>, %4, %cst [1] : vector<8x32xf32> to vector<8xf32>
    %8 = vector.shape_cast %7 : vector<8xf32> to vector<8x1xf32>
    %cst_8 = arith.constant 3.200000e+01 : f32
    %9 = vector.broadcast %cst_8 : f32 to vector<8x1xf32>
    %10 = arith.divf %8, %9 : vector<8x1xf32>
    %11 = vector.broadcast %10 : vector<8x1xf32> to vector<8x32xf32>
    %12 = arith.subf %4, %11 : vector<8x32xf32>
    %13 = arith.mulf %12, %12 : vector<8x32xf32>
    %cst_9 = arith.constant dense<0.000000e+00> : vector<8xf32>
    %14 = vector.multi_reduction <add>, %13, %cst_9 [1] : vector<8x32xf32> to vector<8xf32>
    %15 = vector.shape_cast %14 : vector<8xf32> to vector<8x1xf32>
    %cst_10 = arith.constant 3.200000e+01 : f32
    %16 = vector.broadcast %cst_10 : f32 to vector<8x1xf32>
    %17 = arith.divf %15, %16 : vector<8x1xf32>
    %cst_11 = arith.constant 9.99999996E-13 : f32
    %18 = vector.broadcast %cst_11 : f32 to vector<8x1xf32>
    %19 = arith.addf %17, %18 : vector<8x1xf32>
    %20 = math.rsqrt %19 : vector<8x1xf32>
    %21 = vector.broadcast %10 : vector<8x1xf32> to vector<8x32xf32>
    %22 = arith.subf %4, %21 : vector<8x32xf32>
    %23 = vector.broadcast %20 : vector<8x1xf32> to vector<8x32xf32>
    %24 = arith.mulf %22, %23 : vector<8x32xf32>
    %25 = vector.broadcast %5 : vector<1x32xf32> to vector<8x32xf32>
    %26 = arith.mulf %24, %25 : vector<8x32xf32>
    %27 = vector.broadcast %6 : vector<1x32xf32> to vector<8x32xf32>
    %28 = arith.addf %26, %27 : vector<8x32xf32>
    %29 = arith.truncf %28 : vector<8x32xf32> to vector<8x32xbf16>
    %c0_12 = arith.constant 0 : index
    %c0_13 = arith.constant 0 : index
    %c0_14 = arith.constant 0 : index
    %30 = vector.load %arg5[%c0_12, %c0_13, %c0_14] : memref<1x8x32xbf16, #tpu.memory_space<vmem>>, vector<1x8x32xbf16>
    %31 = vector.shape_cast %30 : vector<1x8x32xbf16> to vector<8x32xbf16>
    %32 = vector.shape_cast %29 : vector<8x32xbf16> to vector<1x8x32xbf16>
    tpu.vector_store %arg5[%c0_12, %c0_13, %c0_14], %32 {strides = array<i32>} : memref<1x8x32xbf16, #tpu.memory_space<vmem>>, vector<1x8x32xbf16>,
    return
  }
  func.func @transform_0(%arg0: i32) -> (i32, i32, i32) {
    %c0_i32 = arith.constant 0 : i32
    %c0_i32_0 = arith.constant 0 : i32
    %c0_i32_1 = arith.constant 0 : i32
    return %arg0, %c0_i32, %c0_i32_0 : i32, i32, i32
  }
  func.func @transform_1(%arg0: i32) -> (i32, i32) {
    %c0_i32 = arith.constant 0 : i32
    %c0_i32_0 = arith.constant 0 : i32
    %c0_i32_1 = arith.constant 0 : i32
    return %c0_i32, %c0_i32_0 : i32, i32
  }
  func.func @transform_2(%arg0: i32) -> (i32, i32) {
    %c0_i32 = arith.constant 0 : i32
    %c0_i32_0 = arith.constant 0 : i32
    %c0_i32_1 = arith.constant 0 : i32
    return %c0_i32, %c0_i32_0 : i32, i32
  }
  func.func @transform_3(%arg0: i32) -> (i32, i32) {
    %c0_i32 = arith.constant 0 : i32
    %c0_i32_0 = arith.constant 0 : i32
    %c0_i32_1 = arith.constant 0 : i32
    return %c0_i32, %c0_i32_0 : i32, i32
  }
  func.func @transform_4(%arg0: i32) -> (i32, i32, i32) {
    %c0_i32 = arith.constant 0 : i32
    %c0_i32_0 = arith.constant 0 : i32
    %c0_i32_1 = arith.constant 0 : i32
    return %arg0, %c0_i32, %c0_i32_0 : i32, i32, i32
  }
}

</mosaic_0001>

<llo_original>
// kernel: tpu_custom_call.1
$region0: #{tpu_custom_call.1}
  #allocation0 [shape = 'u32[]', space=smem, size = 0x4, offset = 0x4, fixed_abs, tag = 'smem constant byte address 0x4 - core index']
  #allocation1 [shape = 'u32[72,128]{1,0:T(1,128)}', space=vmem, size = 0x9000, scoped, tag = 'internal scratch']
  %s0 = inlined_call_operand.hbm [shape: bf16[2,8,32], index: 0, kind: input, shape index: {}]
  %s1 = inlined_call_operand.hbm [shape: f32[8,32], index: 1, kind: input, shape index: {}]
  %s2 = inlined_call_operand.vmem [shape: f32[1,32], index: 2, kind: input, shape index: {}]
  %s3 = inlined_call_operand.vmem [shape: f32[1,32], index: 3, kind: input, shape index: {}]
  %s4 = inlined_call_operand.hbm [shape: bf16[2,8,32], index: 4, kind: output, shape index: {}]
  %s5 = sld [smem:[#allocation0]]
  $region57: #{tpu_custom_call.1} parent=0
    _
  %s7 = ssub.s32 1, %s5
  %s8 = scalar_select 0, %s7, %s5
  $region1: #{tpu_custom_call.1} parent=0
    #allocation2 [shape = 'u8[4096]{0}', space=vmem, size = 0x1000, scoped, tag = 'input window, operand 0']
    #allocation3 [shape = 's32[2]{0}', space=sflag, size = 0x8, scoped, tag = 'scoped memory for tpu_custom_call.1']
    #allocation4 [shape = 's32[2]{0}', space=sflag, size = 0x8, scoped, tag = 'scoped memory for tpu_custom_call.1']
    #allocation5 [shape = 'u8[4096]{0}', space=vmem, size = 0x1000, scoped, tag = 'input window, operand 1, single buffered']
    #allocation6 [shape = 's32[1]{0}', space=sflag, size = 0x4, scoped, tag = 'scoped memory for tpu_custom_call.1']
    #allocation7 [shape = 'u8[4096]{0}', space=vmem, size = 0x1000, scoped, tag = 'output window, operand 0']
    %9 = vsyncpa [#allocation3], 0
    %s10 = scalar_lea.sflag [#allocation3], 1
    %11 = vsyncpa %s10, 0
    %12 = vsyncpa [#allocation6], 0
    %13 = vsyncpa [#allocation4], 0
    %s14 = scalar_lea.sflag [#allocation4], 1
    %15 = vsyncpa %s14, 0
    loop: start=0, step=1, limit=4
    $region2: #{tpu_custom_call.1} parent=1 // loop_pre_header
      _
    $region3: #{tpu_custom_call.1} parent=1 // loop_header
      %s17 = sphi 0, %s21
      %p18 = scmp.ge.s32.totalorder %s17, 4
      %s27 = sphi 0, %s29
      %s30 = sphi 0, %s27
      %s31 = sphi 0, %s30
      %s47 = sphi 0, %s31
      %s51 = sphi 0, %s51
      %s53 = sphi 0, %s51
      %s54 = sphi 0, %s53
      %s68 = sphi 0, %s54
      %s72 = sphi 0, %s72
      %s74 = sphi 0, %s72
      %s75 = sphi 0, %s74
      %s89 = sphi 0, %s75
      %s93 = sphi 0, %s93
      %s95 = sphi 0, %s93
      %s96 = sphi 0, %s95
      %s110 = sphi 0, %s96
      %s116 = sphi 0, %s118
      %s119 = sphi 0, %s116
      %s120 = sphi 0, %s119
      %s136 = sphi 0, %s120
    $region4: #{tpu_custom_call.1} parent=1 // loop_header_branch
      %20 = sbr.rel (%p18) target = $region8
    $region5: #{tpu_custom_call.1} parent=1 // loop_body
      %s22 = ssub.s32 %s17, 1
      %s23 = ssub.s32 %s17, 2
      %s24 = sadd.s32 %s17, 1
      %s25 = ssub.s32 %s17, %s24
      %p26 = scmp.eq.s32.totalorder %s25, 0
      %s28 = sadd.s32 %s27, 1
      %s29 = scalar_select %p26, %s27, %s28
      %p32 = pneg %p26
      %p33 = scmp.eq.s32.totalorder %s17, 1
      %p34 = por %p32, %p33
      %p35 = scmp.ne.s32.totalorder %s27, %s30
      %p36 = scmp.eq.s32.totalorder %s17, 0
      %p37 = por %p35, %p36
      %p38 = scmp.ne.s32.totalorder %s27, %s30
      %p39 = scmp.eq.s32.totalorder %s22, 1
      %p40 = por %p38, %p39
      %p41 = scmp.ne.s32.totalorder %s30, %s31
      %p42 = scmp.eq.s32.totalorder %s22, 0
      %p43 = por %p41, %p42
      %p44 = scmp.ne.s32.totalorder %s30, %s31
      %p45 = scmp.eq.s32.totalorder %s23, 1
      %p46 = por %p44, %p45
      %p48 = scmp.ne.s32.totalorder %s31, %s47
      %p49 = scmp.eq.s32.totalorder %s23, 0
      %p50 = por %p48, %p49
      %s52 = sadd.s32 %s51, 1
      %p55 = scmp.eq.s32.totalorder %s17, 1
      %p56 = scmp.ne.s32.totalorder %s51, %s53
      %p57 = scmp.eq.s32.totalorder %s17, 0
      %p58 = por %p56, %p57
      %p59 = scmp.ne.s32.totalorder %s51, %s53
      %p60 = scmp.eq.s32.totalorder %s22, 1
      %p61 = por %p59, %p60
      %p62 = scmp.ne.s32.totalorder %s53, %s54
      %p63 = scmp.eq.s32.totalorder %s22, 0
      %p64 = por %p62, %p63
      %p65 = scmp.ne.s32.totalorder %s53, %s54
      %p66 = scmp.eq.s32.totalorder %s23, 1
      %p67 = por %p65, %p66
      %p69 = scmp.ne.s32.totalorder %s54, %s68
      %p70 = scmp.eq.s32.totalorder %s23, 0
      %p71 = por %p69, %p70
      %s73 = sadd.s32 %s72, 1
      %p76 = scmp.eq.s32.totalorder %s17, 1
      %p77 = scmp.ne.s32.totalorder %s72, %s74
      %p78 = scmp.eq.s32.totalorder %s17, 0
      %p79 = por %p77, %p78
      %p80 = scmp.ne.s32.totalorder %s72, %s74
      %p81 = scmp.eq.s32.totalorder %s22, 1
      %p82 = por %p80, %p81
      %p83 = scmp.ne.s32.totalorder %s74, %s75
      %p84 = scmp.eq.s32.totalorder %s22, 0
      %p85 = por %p83, %p84
      %p86 = scmp.ne.s32.totalorder %s74, %s75
      %p87 = scmp.eq.s32.totalorder %s23, 1
      %p88 = por %p86, %p87
      %p90 = scmp.ne.s32.totalorder %s75, %s89
      %p91 = scmp.eq.s32.totalorder %s23, 0
      %p92 = por %p90, %p91
      %s94 = sadd.s32 %s93, 1
      %p97 = scmp.eq.s32.totalorder %s17, 1
      %p98 = scmp.ne.s32.totalorder %s93, %s95
      %p99 = scmp.eq.s32.totalorder %s17, 0
      %p100 = por %p98, %p99
      %p101 = scmp.ne.s32.totalorder %s93, %s95
      %p102 = scmp.eq.s32.totalorder %s22, 1
      %p103 = por %p101, %p102
      %p104 = scmp.ne.s32.totalorder %s95, %s96
      %p105 = scmp.eq.s32.totalorder %s22, 0
      %p106 = por %p104, %p105
      %p107 = scmp.ne.s32.totalorder %s95, %s96
      %p108 = scmp.eq.s32.totalorder %s23, 1
      %p109 = por %p107, %p108
      %p111 = scmp.ne.s32.totalorder %s96, %s110
      %p112 = scmp.eq.s32.totalorder %s23, 0
      %p113 = por %p111, %p112
      %s114 = ssub.s32 %s17, %s24
      %p115 = scmp.eq.s32.totalorder %s114, 0
      %s117 = sadd.s32 %s116, 1
      %s118 = scalar_select %p115, %s116, %s117
      %p121 = pneg %p115
      %p122 = scmp.eq.s32.totalorder %s17, 1
      %p123 = por %p121, %p122
      %p124 = scmp.ne.s32.totalorder %s116, %s119
      %p125 = scmp.eq.s32.totalorder %s17, 0
      %p126 = por %p124, %p125
      %p127 = scmp.ne.s32.totalorder %s116, %s119
      %p128 = scmp.eq.s32.totalorder %s22, 1
      %p129 = por %p127, %p128
      %p130 = scmp.ne.s32.totalorder %s119, %s120
      %p131 = scmp.eq.s32.totalorder %s22, 0
      %p132 = por %p130, %p131
      %p133 = scmp.ne.s32.totalorder %s119, %s120
      %p134 = scmp.eq.s32.totalorder %s23, 1
      %p135 = por %p133, %p134
      %p137 = scmp.ne.s32.totalorder %s120, %s136
      %p138 = scmp.eq.s32.totalorder %s23, 0
      %p139 = por %p137, %p138
      %p140 = scmp.le.s32.totalorder 1, %s17
      %p141 = scmp.lt.s32.totalorder %s17, 3
      %p142 = pnand %p140, %p141
      %p143 = pneg %p142
      // Predicated region
      $region9: #{tpu_custom_call.1} parent=5 // pred_check
        _
      $region10: #{tpu_custom_call.1} parent=5 // pred_check_branch
        %145 = sbr.rel (%p142) target = $region12
      $region11: #{tpu_custom_call.1} parent=5 // pred_region
        %s146 = ssub.s32 %s17, 1
        // Predicated region
        $region13: #{tpu_custom_call.1} parent=11 // pred_check
          %p147 = pneg %p64
        $region14: #{tpu_custom_call.1} parent=11 // pred_check_branch
          %149 = sbr.rel (%p147) target = $region16
        $region15: #{tpu_custom_call.1} parent=11 // pred_region
          %151 = vsyncadd [#allocation6], 0
          %s153 = sshll.u32 %s1, 4
          %s154 = int_to_ptr.hbm [resolvable:$true] %s153
          %s155 = sshll.u32 [#allocation5], 4
          %s156 = int_to_ptr.vmem [resolvable:$true] %s155
          %158 = dma.hbm_to_vmem [thread:$0]  %s154, 128, %s156, [#allocation6]
        $region16: #{tpu_custom_call.1} parent=11 // pred_fallthru
          _
        // Predicated region
        $region17: #{tpu_custom_call.1} parent=11 // pred_check
          %p159 = pneg %p85
        $region18: #{tpu_custom_call.1} parent=11 // pred_check_branch
          %161 = sbr.rel (%p159) target = $region20
        $region19: #{tpu_custom_call.1} parent=11 // pred_region
          _
        $region20: #{tpu_custom_call.1} parent=11 // pred_fallthru
          _
        // Predicated region
        $region21: #{tpu_custom_call.1} parent=11 // pred_check
          %p162 = pneg %p106
        $region22: #{tpu_custom_call.1} parent=11 // pred_check_branch
          %164 = sbr.rel (%p162) target = $region24
        $region23: #{tpu_custom_call.1} parent=11 // pred_region
          _
        $region24: #{tpu_custom_call.1} parent=11 // pred_fallthru
          _
      $region12: #{tpu_custom_call.1} parent=5 // pred_fallthru
        _
      %p165 = scmp.lt.s32.totalorder %s17, 2
      // Predicated region
      $region25: #{tpu_custom_call.1} parent=5 // pred_check
        %p166 = pneg %p165
      $region26: #{tpu_custom_call.1} parent=5 // pred_check_branch
        %168 = sbr.rel (%p166) target = $region28
      $region27: #{tpu_custom_call.1} parent=5 // pred_region
        // Predicated region
        $region29: #{tpu_custom_call.1} parent=27 // pred_check
          %p169 = pneg %p37
        $region30: #{tpu_custom_call.1} parent=27 // pred_check_branch
          %171 = sbr.rel (%p169) target = $region32
        $region31: #{tpu_custom_call.1} parent=27 // pred_region
          %s172 = sand.u32 %s27, 1
          %s173 = scalar_lea.sflag [#allocation3], %s172
          %s174 = sand.u32 %s27, 1
          %s175 = smul.addr %s174, 4
          %s176 = scalar_lea.vmem [#allocation2], %s175
          %178 = vsyncadd %s173, 0
          %s179 = smul.addr %s17, 4
          %s180 = scalar_lea.hbm %s0, %s179
          %s182 = sshll.u32 %s180, 4
          %s183 = int_to_ptr.hbm [resolvable:$true] %s182
          %s184 = sshll.u32 %s176, 4
          %s185 = int_to_ptr.vmem [resolvable:$true] %s184
          %187 = dma.hbm_to_vmem [thread:$0]  %s183, 64, %s185, %s173
        $region32: #{tpu_custom_call.1} parent=27 // pred_fallthru
          _
      $region28: #{tpu_custom_call.1} parent=5 // pred_fallthru
        _
      %p188 = scmp.le.s32.totalorder 1, %s17
      %p189 = scmp.lt.s32.totalorder %s17, 3
      %p190 = pnand %p188, %p189
      %p191 = pneg %p190
      // Predicated region
      $region33: #{tpu_custom_call.1} parent=5 // pred_check
        _
      $region34: #{tpu_custom_call.1} parent=5 // pred_check_branch
        %193 = sbr.rel (%p190) target = $region36
      $region35: #{tpu_custom_call.1} parent=5 // pred_region
        %s194 = ssub.s32 %s17, 1
        %s195 = sand.u32 %s30, 1
        %s196 = scalar_lea.sflag [#allocation3], %s195
        %s197 = sand.u32 %s30, 1
        %s198 = smul.addr %s197, 4
        %s199 = scalar_lea.vmem [#allocation2], %s198
        // Predicated region
        $region37: #{tpu_custom_call.1} parent=35 // pred_check
          %p200 = pneg %p43
        $region38: #{tpu_custom_call.1} parent=35 // pred_check_branch
          %202 = sbr.rel (%p200) target = $region40
        $region39: #{tpu_custom_call.1} parent=35 // pred_region
          %204 = dma.done %s196, 64
        $region40: #{tpu_custom_call.1} parent=35 // pred_fallthru
          _
        // Predicated region
        $region41: #{tpu_custom_call.1} parent=35 // pred_check
          %p205 = pneg %p64
        $region42: #{tpu_custom_call.1} parent=35 // pred_check_branch
          %207 = sbr.rel (%p205) target = $region44
        $region43: #{tpu_custom_call.1} parent=35 // pred_region
          %209 = dma.done [#allocation6], 128
        $region44: #{tpu_custom_call.1} parent=35 // pred_fallthru
          _
        %s210 = sand.u32 %s30, 1
        %s211 = scalar_lea.sflag [#allocation3], %s210
        %s212 = sand.u32 %s30, 1
        %s213 = smul.addr %s212, 4
        %s214 = scalar_lea.vmem [#allocation2], %s213
        %p215 = pneg %p43
        %p216 = pneg %p40
        %p217 = pneg %p64
        %p218 = pneg %p61
        %p219 = pneg %p85
        %p220 = pneg %p82
        %p221 = pneg %p106
        %p222 = pneg %p103
        %p223 = pneg %p132
        %p224 = pneg %p129
        %s225 = sand.u32 %s119, 1
        %s226 = scalar_lea.sflag [#allocation4], %s225
        %s227 = sand.u32 %s119, 1
        %s228 = smul.addr %s227, 4
        %s229 = scalar_lea.vmem [#allocation7], %s228
        %v230 = vld [vmem:[%s199] sm:$0xf]
        %v231 = vunpack.c.l.bf16 %v230
        %v232 = vld [vmem:[#allocation5] sm:$0xff]
        %v233 = vadd.f32 %v231, %v232
        %v234 = vld [vmem:[%s2] sm:$0x1]
        %v235 = vld [vmem:[%s3] sm:$0x1]
        %vm236 = vcmask 261120
        %v237 = vsel %vm236, %v233, 0.0
        %238 = vadd.xlane.f32.xlu0 %v237
        %v239 = vpop.xlane.xlu0 %238
        %v240 = vrcp.pop 32.0
        %v241 = vmul.f32 32.0, %v240
        %v242 = vsub.f32 1.0, %v241
        %v243 = vmul.f32 %v240, %v242
        %v244 = vadd.f32 %v240, %v243
        %vm245 = vweird.f32 %v240
        %v246 = vsel %vm245, %v240, %v244
        %v247 = vmul.f32 %v239, %v246
        %v248 = vsub.f32 %v233, %v247
        %v249 = vmul.f32 %v248, %v248
        %v250 = vsel %vm236, %v249, 0.0
        %251 = vadd.xlane.f32.xlu0 %v250
        %v252 = vpop.xlane.xlu0 %251
        %v253 = vmul.f32 %v252, %v246
        %v254 = vadd.f32 %v253, 1e-12
        %v255 = vrsqrt.pop %v254
        %v256 = vmul.f32 %v255, %v254
        %v257 = vmul.f32 %v256, %v255
        %v258 = vmul.f32 0.5, %v257
        %v259 = vsub.f32 1.5, %v258
        %v260 = vmul.f32 %v255, %v259
        %vm261 = vweird.f32 %v254
        %vm262 = vweird.f32 %v255
        %vm263 = vmor %vm261, %vm262
        %v264 = vsel %vm263, %v255, %v260
        %v265 = vmul.f32 %v248, %v264
        %v267 = vperm.slane %v234, 0
        %v269 = vmul.f32 %v265, %v267
        %v271 = vperm.slane %v235, 0
        %v273 = vadd.f32 %v269, %v271
        %v274 = vpack.c.bf16 %v273, %v273
        %vm275 = vcmask 257024
        %276 = vst.msk [vmem:[%s229] sm:$0xf] %vm275, %v274
        %s277 = sand.u32 %s119, 1
        %s278 = scalar_lea.sflag [#allocation4], %s277
        %s279 = sand.u32 %s119, 1
        %s280 = smul.addr %s279, 4
        %s281 = scalar_lea.vmem [#allocation7], %s280
        // Predicated region
        $region45: #{tpu_custom_call.1} parent=35 // pred_check
          %p282 = pneg %p129
        $region46: #{tpu_custom_call.1} parent=35 // pred_check_branch
          %284 = sbr.rel (%p282) target = $region48
        $region47: #{tpu_custom_call.1} parent=35 // pred_region
          %286 = vsyncadd %s278, 0
          %s287 = smul.addr %s22, 4
          %s288 = scalar_lea.hbm %s4, %s287
          %s290 = sshll.u32 %s281, 4
          %s291 = int_to_ptr.vmem [resolvable:$true] %s290
          %s292 = sshll.u32 %s288, 4
          %s293 = int_to_ptr.hbm [resolvable:$true] %s292
          %295 = dma.vmem_to_hbm [thread:$0]  %s291, 64, %s293, %s278
        $region48: #{tpu_custom_call.1} parent=35 // pred_fallthru
          _
      $region36: #{tpu_custom_call.1} parent=5 // pred_fallthru
        _
      %p296 = scmp.le.s32.totalorder 2, %s17
      // Predicated region
      $region49: #{tpu_custom_call.1} parent=5 // pred_check
        %p297 = pneg %p296
      $region50: #{tpu_custom_call.1} parent=5 // pred_check_branch
        %299 = sbr.rel (%p297) target = $region52
      $region51: #{tpu_custom_call.1} parent=5 // pred_region
        %s300 = ssub.s32 %s17, 2
        // Predicated region
        $region53: #{tpu_custom_call.1} parent=51 // pred_check
          %p301 = pneg %p135
        $region54: #{tpu_custom_call.1} parent=51 // pred_check_branch
          %303 = sbr.rel (%p301) target = $region56
        $region55: #{tpu_custom_call.1} parent=51 // pred_region
          %s304 = sand.u32 %s120, 1
          %s305 = scalar_lea.sflag [#allocation4], %s304
          %s306 = sand.u32 %s120, 1
          %s307 = smul.addr %s306, 4
          %s308 = scalar_lea.vmem [#allocation7], %s307
          %310 = dma.done %s305, 64
        $region56: #{tpu_custom_call.1} parent=51 // pred_fallthru
          _
      $region52: #{tpu_custom_call.1} parent=5 // pred_fallthru
        _
    $region6: #{tpu_custom_call.1} parent=1 // loop_footer
      %s21 = sadd.s32 1, %s17
    $region7: #{tpu_custom_call.1} parent=1 // loop_footer_branch
      %16 = sbr.rel target = $region3
    $region8: #{tpu_custom_call.1} parent=1 // loop_exit
      _
    %311 = vsyncpa [#allocation3], 1
    %s312 = scalar_lea.sflag [#allocation3], 1
    %313 = vsyncpa %s312, 1
    %314 = vsyncpa [#allocation6], 1
    %315 = vsyncpa [#allocation4], 1
    %s316 = scalar_lea.sflag [#allocation4], 1
    %317 = vsyncpa %s316, 1

</llo_original>
